<compile_context>
chip_gen: v7x
topology: tpu7x:2x2x1
jax: 0.10.0
libtpu: 0.0.40
codegen_flags: <defaults>
</compile_context>

<pallas_src>
import jax
import jax.numpy as jnp
from jax.experimental import pallas as pl
from jax.experimental.pallas import tpu as pltpu

LN_EPS = 1e-5          # torch.nn.LayerNorm default eps
LANE = 128
SUBLANE = 8


def _round_up(v, m):
    return ((v + m - 1) // m) * m


def _layernorm_f32(z, gamma, beta):
    mu = jnp.mean(z, axis=-1, keepdims=True)
    var = jnp.mean((z - mu) ** 2, axis=-1, keepdims=True)
    return (z - mu) * jax.lax.rsqrt(var + LN_EPS) * gamma + beta


def _masked_layernorm_f32(z, gamma, beta, valid):
    """LayerNorm over the first `valid` columns of a zero-padded [M, Hp] tensor."""
    m, hp = z.shape
    if valid == hp:
        return _layernorm_f32(z, gamma, beta)
    inv = 1.0 / float(valid)
    mask = jax.lax.broadcasted_iota(jnp.int32, (m, hp), 1) < valid
    zm = jnp.where(mask, z, 0.0)
    mu = jnp.sum(zm, axis=-1, keepdims=True) * inv
    d = jnp.where(mask, z - mu, 0.0)
    var = jnp.sum(d * d, axis=-1, keepdims=True) * inv
    out = d * jax.lax.rsqrt(var + LN_EPS) * gamma + beta
    return jnp.where(mask, out, 0.0)


# ----------------------------- Pallas kernel -------------------------------- #

def _make_mlp_kernel(h_valid):
    """Fused MLPInputLayer on one [tm, Fp] row tile.

    Refs: x (bf16 [tm, Fp]), w1 (bf16 [Fp, Hp]), w2 (bf16 [Hp, Hp]),
          vecs (f32 [4, Hp] = b1, b2, gamma, beta), out (f32 [tm, Hp]).
    """

    def kernel(x_ref, w1_ref, w2_ref, vecs_ref, o_ref):
        vecs = vecs_ref[...]                                   # [4, Hp] f32

        # ReLU(W1 x + b1)   (f32 accumulation on the MXU)
        h = jnp.dot(x_ref[...], w1_ref[...], preferred_element_type=jnp.float32)
        h = jnp.maximum(h + vecs[0:1, :], 0.0)

        # W2 h + b2
        z = jnp.dot(h.astype(jnp.bfloat16), w2_ref[...],
                    preferred_element_type=jnp.float32) + vecs[1:2, :]

        # LayerNorm over the valid (unpadded) feature width; .squeeze(1) is a no-op.
        o_ref[...] = _masked_layernorm_f32(z, vecs[2:3, :], vecs[3:4, :], h_valid)

    return kernel


# ----------------------------- wrapper --------------------------------------- #

def mlp_input_layer_forward(h, params, *, row_tile=128):
    """Fused Pallas forward of MLPInputLayer.

    h:      [N, F_in] (or [N, 1, F_in]) float node features.
    params: dict(w1[F_in,H], b1[H], w2[H,H], b2[H], gamma[H], beta[H]).
    Returns [N, H] float32.
    """
    if h.ndim == 3 and h.shape[1] == 1:     # torch .squeeze(1) path for [N, 1, F] inputs
        h = h[:, 0, :]
    n, f_in = h.shape
    hid = params["w1"].shape[1]

    fp = _round_up(f_in, LANE)
    hp = _round_up(hid, LANE)
    tm = min(row_tile, _round_up(n, SUBLANE))
    np_ = _round_up(n, tm)
    bf16 = jnp.bfloat16

    def pad_to(a, shape, value=0.0):
        pads = [(0, t - s) for s, t in zip(a.shape, shape)]
        if all(p == (0, 0) for p in pads):
            return a
        return jnp.pad(a, pads, constant_values=value)

    x_p = pad_to(h.astype(jnp.float32), (np_, fp)).astype(bf16)
    w1_p = pad_to(params["w1"], (fp, hp)).astype(bf16)
    w2_p = pad_to(params["w2"], (hp, hp)).astype(bf16)
    vecs = jnp.stack([
        pad_to(params["b1"], (hp,)),
        pad_to(params["b2"], (hp,)),
        pad_to(params["gamma"], (hp,), 1.0),
        pad_to(params["beta"], (hp,)),
    ]).astype(jnp.float32)                                     # [4, Hp]

    grid = (np_ // tm,)
    out = pl.pallas_call(
        _make_mlp_kernel(hid),
        out_shape=jax.ShapeDtypeStruct((np_, hp), jnp.float32),
        grid=grid,
        in_specs=[
            pl.BlockSpec((tm, fp), lambda i: (i, 0)),
            pl.BlockSpec((fp, hp), lambda i: (0, 0)),
            pl.BlockSpec((hp, hp), lambda i: (0, 0)),
            pl.BlockSpec((4, hp), lambda i: (0, 0)),
        ],
        out_specs=pl.BlockSpec((tm, hp), lambda i: (i, 0)),
        compiler_params=pltpu.CompilerParams(dimension_semantics=("parallel",)),
    )(x_p, w1_p, w2_p, vecs)
    return out[:n, :hid]


# ----------------------------- references (pure JAX) ------------------------- #

def _bf16_dot(a, b):
    return jnp.dot(a.astype(jnp.bfloat16), b.astype(jnp.bfloat16),
                   preferred_element_type=jnp.float32)


def forward_ref_bf16(params, h):
    """Matches the kernel's numerics (bf16 MXU operands, f32 accumulation / LayerNorm)."""
    z = jnp.maximum(_bf16_dot(h, params["w1"]) + params["b1"], 0.0)
    z = _bf16_dot(z, params["w2"]) + params["b2"]
    return _layernorm_f32(z, params["gamma"], params["beta"])


def forward_ref_f32(params, h):
    """Exact PyTorch (f32) semantics, loose sanity check of the bf16 path."""
    z = jnp.maximum(h @ params["w1"] + params["b1"], 0.0)
    z = z @ params["w2"] + params["b2"]
    return _layernorm_f32(z, params["gamma"], params["beta"])


# ----------------------------- main ------------------------------------------ #

if __name__ == "__main__":
    key = jax.random.PRNGKey(0)

    N = 32          # nodes
    F_IN = 64       # h_feats
    HIDDEN = 64     # hidden_layer_size

    keys = jax.random.split(key, 8)
    ki = iter(keys)

    def glorot(k, shape):
        fan_in, fan_out = shape
        lim = (6.0 / (fan_in + fan_out)) ** 0.5
        return jax.random.uniform(k, shape, jnp.float32, -lim, lim)

    params = {
        "w1": glorot(next(ki), (F_IN, HIDDEN)),
        "b1": jax.random.normal(next(ki), (HIDDEN,), jnp.float32) * 0.01,
        "w2": glorot(next(ki), (HIDDEN, HIDDEN)),
        "b2": jax.random.normal(next(ki), (HIDDEN,), jnp.float32) * 0.01,
        "gamma": jnp.ones((HIDDEN,), jnp.float32),
        "beta": jnp.zeros((HIDDEN,), jnp.float32),
    }
    x = jax.random.normal(next(ki), (N, F_IN), jnp.float32)

    out = jax.block_until_ready(mlp_input_layer_forward(x, params))
    assert out.shape == (N, HIDDEN), out.shape

    ref_bf16 = forward_ref_bf16(params, x)
    ref_f32 = forward_ref_f32(params, x)
    assert jnp.allclose(out, ref_bf16, atol=2e-3, rtol=2e-3), "mismatch vs bf16 reference"
    assert jnp.allclose(out, ref_f32, atol=1e-1, rtol=1e-1), "mismatch vs f32 reference"

    # Also check the [N, 1, F] input path (exercises the .squeeze(1) semantics).
    out3d = jax.block_until_ready(mlp_input_layer_forward(x[:, None, :], params))
    assert jnp.allclose(out3d, out), "squeeze(1) path mismatch"

    print("KERNEL_OK")
</pallas_src>

<mosaic_0001>
module attributes {stable_mosaic.version = 11 : i64} {
  func.func @kernel(%arg0: i32, %arg1: memref<32x128xbf16, #tpu.memory_space<vmem>>, %arg2: memref<128x128xbf16, #tpu.memory_space<vmem>>, %arg3: memref<128x128xbf16, #tpu.memory_space<vmem>>, %arg4: memref<4x128xf32, #tpu.memory_space<vmem>>, %arg5: memref<32x128xf32, #tpu.memory_space<vmem>>) attributes {dimension_semantics = [#tpu.dimension_semantics<parallel>], iteration_bounds = array<i64: 1>, scalar_prefetch = 0 : i64, scratch_operands = 0 : i64, tpu.core_type = #tpu.core_type<tc>, window_params = [{transform_indices = @transform_0, window_bounds = array<i64: 32, 128>}, {pipeline_mode = #tpu.pipeline_mode<synchronous>, transform_indices = @transform_1, window_bounds = array<i64: 128, 128>}, {pipeline_mode = #tpu.pipeline_mode<synchronous>, transform_indices = @transform_2, window_bounds = array<i64: 128, 128>}, {pipeline_mode = #tpu.pipeline_mode<synchronous>, transform_indices = @transform_3, window_bounds = array<i64: 4, 128>}, {transform_indices = @transform_4, window_bounds = array<i64: 32, 128>}]} {
    %c0 = arith.constant 0 : index
    %c0_0 = arith.constant 0 : index
    %0 = vector.load %arg4[%c0, %c0_0] : memref<4x128xf32, #tpu.memory_space<vmem>>, vector<4x128xf32>
    %c0_1 = arith.constant 0 : index
    %c0_2 = arith.constant 0 : index
    %1 = vector.load %arg1[%c0_1, %c0_2] : memref<32x128xbf16, #tpu.memory_space<vmem>>, vector<32x128xbf16>
    %c0_3 = arith.constant 0 : index
    %c0_4 = arith.constant 0 : index
    %2 = vector.load %arg2[%c0_3, %c0_4] : memref<128x128xbf16, #tpu.memory_space<vmem>>, vector<128x128xbf16>
    %cst = arith.constant dense<0.000000e+00> : vector<32x128xf32>
    %3 = tpu.matmul %1, %2, %cst {dimension_numbers = #tpu.dot_dimension_numbers<[1], [0], [0], [1], [0, 0, 1, 1], [], []>} : vector<32x128xbf16>, vector<128x128xbf16>, vector<32x128xf32> -> vector<32x128xf32>
    %4 = vector.extract_strided_slice %0 {offsets = [0, 0], sizes = [1, 128], strides = [1, 1]} : vector<4x128xf32> to vector<1x128xf32>
    %5 = vector.broadcast %4 : vector<1x128xf32> to vector<32x128xf32>
    %6 = arith.addf %3, %5 : vector<32x128xf32>
    %cst_5 = arith.constant 0.000000e+00 : f32
    %7 = vector.broadcast %cst_5 : f32 to vector<32x128xf32>
    %8 = arith.maximumf %6, %7 : vector<32x128xf32>
    %9 = arith.truncf %8 : vector<32x128xf32> to vector<32x128xbf16>
    %c0_6 = arith.constant 0 : index
    %c0_7 = arith.constant 0 : index
    %10 = vector.load %arg3[%c0_6, %c0_7] : memref<128x128xbf16, #tpu.memory_space<vmem>>, vector<128x128xbf16>
    %cst_8 = arith.constant dense<0.000000e+00> : vector<32x128xf32>
    %11 = tpu.matmul %9, %10, %cst_8 {dimension_numbers = #tpu.dot_dimension_numbers<[1], [0], [0], [1], [0, 0, 1, 1], [], []>} : vector<32x128xbf16>, vector<128x128xbf16>, vector<32x128xf32> -> vector<32x128xf32>
    %12 = vector.extract_strided_slice %0 {offsets = [1, 0], sizes = [1, 128], strides = [1, 1]} : vector<4x128xf32> to vector<1x128xf32>
    %13 = vector.broadcast %12 : vector<1x128xf32> to vector<32x128xf32>
    %14 = arith.addf %11, %13 : vector<32x128xf32>
    %15 = vector.extract_strided_slice %0 {offsets = [2, 0], sizes = [1, 128], strides = [1, 1]} : vector<4x128xf32> to vector<1x128xf32>
    %16 = vector.extract_strided_slice %0 {offsets = [3, 0], sizes = [1, 128], strides = [1, 1]} : vector<4x128xf32> to vector<1x128xf32>
    %17 = tpu.iota {dimensions = array<i32: 1>} : vector<32x128xi32>
    %c64_i32 = arith.constant 64 : i32
    %18 = vector.broadcast %c64_i32 : i32 to vector<32x128xi32>
    %19 = arith.cmpi slt, %17, %18 : vector<32x128xi32>
    %cst_9 = arith.constant 0.000000e+00 : f32
    %20 = vector.broadcast %cst_9 : f32 to vector<32x128xf32>
    %21 = arith.select %19, %14, %20 : vector<32x128xi1>, vector<32x128xf32>
    %cst_10 = arith.constant dense<0.000000e+00> : vector<32xf32>
    %22 = vector.multi_reduction <add>, %21, %cst_10 [1] : vector<32x128xf32> to vector<32xf32>
    %23 = vector.shape_cast %22 : vector<32xf32> to vector<32x1xf32>
    %cst_11 = arith.constant 1.562500e-02 : f32
    %24 = vector.broadcast %cst_11 : f32 to vector<32x1xf32>
    %25 = arith.mulf %23, %24 : vector<32x1xf32>
    %26 = vector.broadcast %25 : vector<32x1xf32> to vector<32x128xf32>
    %27 = arith.subf %14, %26 : vector<32x128xf32>
    %cst_12 = arith.constant 0.000000e+00 : f32
    %28 = vector.broadcast %cst_12 : f32 to vector<32x128xf32>
    %29 = arith.select %19, %27, %28 : vector<32x128xi1>, vector<32x128xf32>
    %30 = arith.mulf %29, %29 : vector<32x128xf32>
    %cst_13 = arith.constant dense<0.000000e+00> : vector<32xf32>
    %31 = vector.multi_reduction <add>, %30, %cst_13 [1] : vector<32x128xf32> to vector<32xf32>
    %32 = vector.shape_cast %31 : vector<32xf32> to vector<32x1xf32>
    %cst_14 = arith.constant 1.562500e-02 : f32
    %33 = vector.broadcast %cst_14 : f32 to vector<32x1xf32>
    %34 = arith.mulf %32, %33 : vector<32x1xf32>
    %cst_15 = arith.constant 9.99999974E-6 : f32
    %35 = vector.broadcast %cst_15 : f32 to vector<32x1xf32>
    %36 = arith.addf %34, %35 : vector<32x1xf32>
    %37 = math.rsqrt %36 : vector<32x1xf32>
    %38 = vector.broadcast %37 : vector<32x1xf32> to vector<32x128xf32>
    %39 = arith.mulf %29, %38 : vector<32x128xf32>
    %40 = vector.broadcast %15 : vector<1x128xf32> to vector<32x128xf32>
    %41 = arith.mulf %39, %40 : vector<32x128xf32>
    %42 = vector.broadcast %16 : vector<1x128xf32> to vector<32x128xf32>
    %43 = arith.addf %41, %42 : vector<32x128xf32>
    %cst_16 = arith.constant 0.000000e+00 : f32
    %44 = vector.broadcast %cst_16 : f32 to vector<32x128xf32>
    %45 = arith.select %19, %43, %44 : vector<32x128xi1>, vector<32x128xf32>
    %c0_17 = arith.constant 0 : index
    %c0_18 = arith.constant 0 : index
    %46 = vector.load %arg5[%c0_17, %c0_18] : memref<32x128xf32, #tpu.memory_space<vmem>>, vector<32x128xf32>
    tpu.vector_store %arg5[%c0_17, %c0_18], %45 {strides = array<i32>} : memref<32x128xf32, #tpu.memory_space<vmem>>, vector<32x128xf32>,
    return
  }
  func.func @transform_0(%arg0: i32) -> (i32, i32) {
    %c0_i32 = arith.constant 0 : i32
    %c0_i32_0 = arith.constant 0 : i32
    return %arg0, %c0_i32 : i32, i32
  }
  func.func @transform_1(%arg0: i32) -> (i32, i32) {
    %c0_i32 = arith.constant 0 : i32
    %c0_i32_0 = arith.constant 0 : i32
    %c0_i32_1 = arith.constant 0 : i32
    return %c0_i32, %c0_i32_0 : i32, i32
  }
  func.func @transform_2(%arg0: i32) -> (i32, i32) {
    %c0_i32 = arith.constant 0 : i32
    %c0_i32_0 = arith.constant 0 : i32
    %c0_i32_1 = arith.constant 0 : i32
    return %c0_i32, %c0_i32_0 : i32, i32
  }
  func.func @transform_3(%arg0: i32) -> (i32, i32) {
    %c0_i32 = arith.constant 0 : i32
    %c0_i32_0 = arith.constant 0 : i32
    %c0_i32_1 = arith.constant 0 : i32
    return %c0_i32, %c0_i32_0 : i32, i32
  }
  func.func @transform_4(%arg0: i32) -> (i32, i32) {
    %c0_i32 = arith.constant 0 : i32
    %c0_i32_0 = arith.constant 0 : i32
    return %arg0, %c0_i32 : i32, i32
  }
}

</mosaic_0001>

<llo_original>
// kernel: tpu_custom_call.1
$region0: #{tpu_custom_call.1}
  #allocation0 [shape = 'u32[]', space=smem, size = 0x4, offset = 0x4, fixed_abs, tag = 'smem constant byte address 0x4 - core index']
  #allocation1 [shape = 'u32[144,128]{1,0:T(1,128)}', space=vmem, size = 0x12000, scoped, tag = 'internal scratch']
  %s0 = inlined_call_operand.hbm [shape: bf16[32,128], index: 0, kind: input, shape index: {}]
  %s1 = inlined_call_operand.hbm [shape: bf16[128,128], index: 1, kind: input, shape index: {}]
  %s2 = inlined_call_operand.hbm [shape: bf16[128,128], index: 2, kind: input, shape index: {}]
  %s3 = inlined_call_operand.vmem [shape: f32[4,128], index: 3, kind: input, shape index: {}]
  %s4 = inlined_call_operand.hbm [shape: f32[32,128], index: 4, kind: output, shape index: {}]
  %s5 = sld [smem:[#allocation0]]
  $region38: #{tpu_custom_call.1} parent=0
    _
  %s7 = ssub.s32 1, %s5
  %s8 = scalar_select 0, %s7, %s5
  $region1: #{tpu_custom_call.1} parent=0
    #allocation2 [shape = 'u8[8192]{0}', space=vmem, size = 0x2000, scoped, tag = 'input window, operand 0, single buffered']
    #allocation3 [shape = 's32[1]{0}', space=sflag, size = 0x4, scoped, tag = 'scoped memory for tpu_custom_call.1']
    #allocation4 [shape = 's32[1]{0}', space=sflag, size = 0x4, scoped, tag = 'scoped memory for tpu_custom_call.1']
    #allocation5 [shape = 'u8[32768]{0}', space=vmem, size = 0x8000, scoped, tag = 'input window, operand 1, single buffered']
    #allocation6 [shape = 's32[1]{0}', space=sflag, size = 0x4, scoped, tag = 'scoped memory for tpu_custom_call.1']
    #allocation7 [shape = 'u8[32768]{0}', space=vmem, size = 0x8000, scoped, tag = 'input window, operand 2, single buffered']
    #allocation8 [shape = 'u8[16384]{0}', space=vmem, size = 0x4000, scoped, tag = 'output window, operand 0, single buffered']
    %9 = vsyncpa [#allocation3], 0
    %10 = vsyncpa [#allocation6], 0
    %11 = vsyncpa [#allocation4], 0
    // Predicated region
    $region2: #{tpu_custom_call.1} parent=1 // pred_check
      _
    $region3: #{tpu_custom_call.1} parent=1 // pred_check_branch
      %13 = sbr.rel (0) target = $region5
    $region4: #{tpu_custom_call.1} parent=1 // pred_region
      %s15 = ssub.s32 256, 256
      %16 = vsyncadd [#allocation3], %s15
      %s17 = sshll.u32 [#allocation2], 4
      %s18 = int_to_ptr.vmem [resolvable:$true] %s17
      %23 = dma.hbm_to_vmem [thread:$0]  %s0, 256, %s18, [#allocation3], 64, 64, 4
    $region5: #{tpu_custom_call.1} parent=1 // pred_fallthru
      _
    // Predicated region
    $region6: #{tpu_custom_call.1} parent=1 // pred_check
      _
    $region7: #{tpu_custom_call.1} parent=1 // pred_check_branch
      %25 = sbr.rel (0) target = $region9
    $region8: #{tpu_custom_call.1} parent=1 // pred_region
      %s27 = ssub.s32 1024, 1024
      %28 = vsyncadd [#allocation6], %s27
      %s29 = sshll.u32 [#allocation5], 4
      %s30 = int_to_ptr.vmem [resolvable:$true] %s29
      %35 = dma.hbm_to_vmem [thread:$0]  %s1, 1024, %s30, [#allocation6], 64, 64, 4
    $region9: #{tpu_custom_call.1} parent=1 // pred_fallthru
      _
    // Predicated region
    $region10: #{tpu_custom_call.1} parent=1 // pred_check
      _
    $region11: #{tpu_custom_call.1} parent=1 // pred_check_branch
      %37 = sbr.rel (0) target = $region13
    $region12: #{tpu_custom_call.1} parent=1 // pred_region
      %s39 = ssub.s32 1024, 1024
      %40 = vsyncadd [#allocation6], %s39
      %s41 = sshll.u32 [#allocation7], 4
      %s42 = int_to_ptr.vmem [resolvable:$true] %s41
      %47 = dma.hbm_to_vmem [thread:$0]  %s2, 1024, %s42, [#allocation6], 64, 64, 4
    $region13: #{tpu_custom_call.1} parent=1 // pred_fallthru
      _
    // Predicated region
    $region14: #{tpu_custom_call.1} parent=1 // pred_check
      _
    $region15: #{tpu_custom_call.1} parent=1 // pred_check_branch
      %49 = sbr.rel (0) target = $region17
    $region16: #{tpu_custom_call.1} parent=1 // pred_region
      _
    $region17: #{tpu_custom_call.1} parent=1 // pred_fallthru
      _
    // Predicated region
    $region18: #{tpu_custom_call.1} parent=1 // pred_check
      _
    $region19: #{tpu_custom_call.1} parent=1 // pred_check_branch
      %51 = sbr.rel (0) target = $region21
    $region20: #{tpu_custom_call.1} parent=1 // pred_region
      %52 = dma.done [#allocation3], 256
    $region21: #{tpu_custom_call.1} parent=1 // pred_fallthru
      _
    // Predicated region
    $region22: #{tpu_custom_call.1} parent=1 // pred_check
      _
    $region23: #{tpu_custom_call.1} parent=1 // pred_check_branch
      %54 = sbr.rel (0) target = $region25
    $region24: #{tpu_custom_call.1} parent=1 // pred_region
      %55 = dma.done [#allocation6], 1024
    $region25: #{tpu_custom_call.1} parent=1 // pred_fallthru
      _
    // Predicated region
    $region26: #{tpu_custom_call.1} parent=1 // pred_check
      _
    $region27: #{tpu_custom_call.1} parent=1 // pred_check_branch
      %57 = sbr.rel (0) target = $region29
    $region28: #{tpu_custom_call.1} parent=1 // pred_region
      %58 = dma.done [#allocation6], 1024
    $region29: #{tpu_custom_call.1} parent=1 // pred_fallthru
      _
    %v60 = vld [vmem:[%s3] sm:$0xf]
    %v61 = vld [vmem:[#allocation2] sm:$0xf]
    %v62 = vld [vmem:[#allocation2 + $0x4] sm:$0xf]
    %v63 = vld [vmem:[#allocation2 + $0x8] sm:$0xf]
    %v64 = vld [vmem:[#allocation2 + $0xc] sm:$0xf]
    %v65 = vld [vmem:[#allocation5] sm:$0xf]
    %v66 = vld [vmem:[#allocation5 + $0x4] sm:$0xf]
    %v67 = vld [vmem:[#allocation5 + $0x8] sm:$0xf]
    %v68 = vld [vmem:[#allocation5 + $0xc] sm:$0xf]
    %v69 = vld [vmem:[#allocation5 + $0x10] sm:$0xf]
    %v70 = vld [vmem:[#allocation5 + $0x14] sm:$0xf]
    %v71 = vld [vmem:[#allocation5 + $0x18] sm:$0xf]
    %v72 = vld [vmem:[#allocation5 + $0x1c] sm:$0xf]
    %v73 = vld [vmem:[#allocation5 + $0x20] sm:$0xf]
    %v74 = vld [vmem:[#allocation5 + $0x24] sm:$0xf]
    %v75 = vld [vmem:[#allocation5 + $0x28] sm:$0xf]
    %v76 = vld [vmem:[#allocation5 + $0x2c] sm:$0xf]
    %v77 = vld [vmem:[#allocation5 + $0x30] sm:$0xf]
    %v78 = vld [vmem:[#allocation5 + $0x34] sm:$0xf]
    %v79 = vld [vmem:[#allocation5 + $0x38] sm:$0xf]
    %v80 = vld [vmem:[#allocation5 + $0x3c] sm:$0xf]
    %v81 = vlaneseq
    %v82 = vshrl.u32 %v81, 7
    %v83 = vsub.s32 0, %v82
    %v84 = vrot.slane %v60, %v83
    %v89 = vunpack.c.l.b16 %v61
    %v90 = vunpack.c.l.b16 %v62
    %v91 = vunpack.c.l.b16 %v63
    %v92 = vunpack.c.l.b16 %v64
    %v93 = vpack.c.b16 %v90, %v89
    %v94 = vpack.c.b16 %v92, %v91
    %v113 = vunpack.c.l.b16 %v65
    %v114 = vunpack.c.l.b16 %v66
    %v115 = vunpack.c.l.b16 %v67
    %v116 = vunpack.c.l.b16 %v68
    %v117 = vunpack.c.l.b16 %v69
    %v118 = vunpack.c.l.b16 %v70
    %v119 = vunpack.c.l.b16 %v71
    %v120 = vunpack.c.l.b16 %v72
    %v121 = vunpack.c.l.b16 %v73
    %v122 = vunpack.c.l.b16 %v74
    %v123 = vunpack.c.l.b16 %v75
    %v124 = vunpack.c.l.b16 %v76
    %v125 = vunpack.c.l.b16 %v77
    %v126 = vunpack.c.l.b16 %v78
    %v127 = vunpack.c.l.b16 %v79
    %v128 = vunpack.c.l.b16 %v80
    %v129 = vpack.c.b16 %v114, %v113
    %v130 = vpack.c.b16 %v116, %v115
    %v131 = vpack.c.b16 %v118, %v117
    %v132 = vpack.c.b16 %v120, %v119
    %v133 = vpack.c.b16 %v122, %v121
    %v134 = vpack.c.b16 %v124, %v123
    %v135 = vpack.c.b16 %v126, %v125
    %v136 = vpack.c.b16 %v128, %v127
    %145 = vmatprep.subr.bf16.mxu0 0
    %146 = vmatpush1.bf16.msra.mxu0 %v129
    %147 = vmatprep.subr.bf16.mxu0 0
    %148 = vmatpush1.bf16.msra.mxu0 %v130
    %149 = vmatprep.subr.bf16.mxu0 0
    %150 = vmatpush1.bf16.msra.mxu0 %v131
    %151 = vmatprep.subr.bf16.mxu0 0
    %152 = vmatpush1.bf16.msra.mxu0 %v132
    %153 = vmatprep.subr.bf16.mxu0 0
    %154 = vmatpush1.bf16.msra.mxu0 %v133
    %155 = vmatprep.subr.bf16.mxu0 0
    %156 = vmatpush1.bf16.msra.mxu0 %v134
    %157 = vmatprep.subr.bf16.mxu0 0
    %158 = vmatpush1.bf16.msra.mxu0 %v135
    %159 = vmatprep.subr.bf16.mxu0 0
    %160 = vmatpush1.bf16.msra.mxu0 %v136
    %161 = vmatprep.subr.bf16.mxu0 0
    %162 = vmatpush1.bf16.msra.mxu0 0
    %163 = vmatprep.subr.bf16.mxu0 0
    %164 = vmatpush1.bf16.msra.mxu0 0
    %165 = vmatprep.subr.bf16.mxu0 0
    %166 = vmatpush1.bf16.msra.mxu0 0
    %167 = vmatprep.subr.bf16.mxu0 0
    %168 = vmatpush1.bf16.msra.mxu0 0
    %169 = vmatprep.subr.bf16.mxu0 0
    %170 = vmatpush1.bf16.msra.mxu0 0
    %171 = vmatprep.subr.bf16.mxu0 0
    %172 = vmatpush1.bf16.msra.mxu0 0
    %173 = vmatprep.subr.bf16.mxu0 0
    %174 = vmatpush1.bf16.msra.mxu0 0
    %175 = vmatprep.subr.bf16.mxu0 0
    %176 = vmatpush1.bf16.msra.mxu0 0
    %177 = vmatprep.mubr.bf16.mxu0 0
    %178 = vmatmul.mubr.bf16.gmra.mrb[0].mxu0 %v93
    %v179 = vpop.f32.mrb[0].mxu0
    %v180 = vadd.f32 %v84, %v179
    %v181 = vpop.f32.mrb[0].mxu0
    %v182 = vpop.f32.mrb[0].mxu0
    %v183 = vadd.f32 %v84, %v182
    %v184 = vpop.f32.mrb[0].mxu0
    %185 = vmatprep.mubr.bf16.mxu0 0
    %186 = vmatmul.mubr.bf16.gmra.mrb[0].mxu0 %v94
    %v187 = vpop.f32.mrb[0].mxu0
    %v188 = vadd.f32 %v84, %v187
    %v189 = vpop.f32.mrb[0].mxu0
    %v190 = vpop.f32.mrb[0].mxu0
    %v191 = vadd.f32 %v84, %v190
    %v192 = vpop.f32.mrb[0].mxu0
    %193 = vdwg.mxu0
    %v194 = vmax.f32 %v180, 0.0
    %v195 = vmax.f32 %v183, 0.0
    %v196 = vmax.f32 %v188, 0.0
    %v197 = vmax.f32 %v191, 0.0
    %v198 = vpack.c.bf16 %v195, %v194
    %v199 = vpack.c.bf16 %v197, %v196
    %v200 = vld [vmem:[#allocation7] sm:$0xf]
    %v201 = vld [vmem:[#allocation7 + $0x4] sm:$0xf]
    %v202 = vld [vmem:[#allocation7 + $0x8] sm:$0xf]
    %v203 = vld [vmem:[#allocation7 + $0xc] sm:$0xf]
    %v204 = vld [vmem:[#allocation7 + $0x10] sm:$0xf]
    %v205 = vld [vmem:[#allocation7 + $0x14] sm:$0xf]
    %v206 = vld [vmem:[#allocation7 + $0x18] sm:$0xf]
    %v207 = vld [vmem:[#allocation7 + $0x1c] sm:$0xf]
    %v208 = vld [vmem:[#allocation7 + $0x20] sm:$0xf]
    %v209 = vld [vmem:[#allocation7 + $0x24] sm:$0xf]
    %v210 = vld [vmem:[#allocation7 + $0x28] sm:$0xf]
    %v211 = vld [vmem:[#allocation7 + $0x2c] sm:$0xf]
    %v212 = vld [vmem:[#allocation7 + $0x30] sm:$0xf]
    %v213 = vld [vmem:[#allocation7 + $0x34] sm:$0xf]
    %v214 = vld [vmem:[#allocation7 + $0x38] sm:$0xf]
    %v215 = vld [vmem:[#allocation7 + $0x3c] sm:$0xf]
    %v216 = vlaneseq
    %v217 = vshrl.u32 %v216, 7
    %v218 = vsub.s32 1, %v217
    %v219 = vrot.slane %v60, %v218
    %v236 = vunpack.c.l.b16 %v200
    %v237 = vunpack.c.l.b16 %v201
    %v238 = vunpack.c.l.b16 %v202
    %v239 = vunpack.c.l.b16 %v203
    %v240 = vunpack.c.l.b16 %v204
    %v241 = vunpack.c.l.b16 %v205
    %v242 = vunpack.c.l.b16 %v206
    %v243 = vunpack.c.l.b16 %v207
    %v244 = vunpack.c.l.b16 %v208
    %v245 = vunpack.c.l.b16 %v209
    %v246 = vunpack.c.l.b16 %v210
    %v247 = vunpack.c.l.b16 %v211
    %v248 = vunpack.c.l.b16 %v212
    %v249 = vunpack.c.l.b16 %v213
    %v250 = vunpack.c.l.b16 %v214
    %v251 = vunpack.c.l.b16 %v215
    %v252 = vpack.c.b16 %v237, %v236
    %v253 = vpack.c.b16 %v239, %v238
    %v254 = vpack.c.b16 %v241, %v240
    %v255 = vpack.c.b16 %v243, %v242
    %v256 = vpack.c.b16 %v245, %v244
    %v257 = vpack.c.b16 %v247, %v246
    %v258 = vpack.c.b16 %v249, %v248
    %v259 = vpack.c.b16 %v251, %v250
    %268 = vmatprep.subr.bf16.mxu0 0
    %269 = vmatpush1.bf16.msra.mxu0 %v252
    %270 = vmatprep.subr.bf16.mxu0 0
    %271 = vmatpush1.bf16.msra.mxu0 %v253
    %272 = vmatprep.subr.bf16.mxu0 0
    %273 = vmatpush1.bf16.msra.mxu0 %v254
    %274 = vmatprep.subr.bf16.mxu0 0
    %275 = vmatpush1.bf16.msra.mxu0 %v255
    %276 = vmatprep.subr.bf16.mxu0 0
    %277 = vmatpush1.bf16.msra.mxu0 %v256
    %278 = vmatprep.subr.bf16.mxu0 0
    %279 = vmatpush1.bf16.msra.mxu0 %v257
    %280 = vmatprep.subr.bf16.mxu0 0
    %281 = vmatpush1.bf16.msra.mxu0 %v258
    %282 = vmatprep.subr.bf16.mxu0 0
    %283 = vmatpush1.bf16.msra.mxu0 %v259
    %284 = vmatprep.subr.bf16.mxu0 0
    %285 = vmatpush1.bf16.msra.mxu0 0
    %286 = vmatprep.subr.bf16.mxu0 0
    %287 = vmatpush1.bf16.msra.mxu0 0
    %288 = vmatprep.subr.bf16.mxu0 0
    %289 = vmatpush1.bf16.msra.mxu0 0
    %290 = vmatprep.subr.bf16.mxu0 0
    %291 = vmatpush1.bf16.msra.mxu0 0
    %292 = vmatprep.subr.bf16.mxu0 0
    %293 = vmatpush1.bf16.msra.mxu0 0
    %294 = vmatprep.subr.bf16.mxu0 0
    %295 = vmatpush1.bf16.msra.mxu0 0
    %296 = vmatprep.subr.bf16.mxu0 0
    %297 = vmatpush1.bf16.msra.mxu0 0
    %298 = vmatprep.subr.bf16.mxu0 0
    %299 = vmatpush1.bf16.msra.mxu0 0
    %300 = vmatprep.mubr.bf16.mxu0 0
    %301 = vmatmul.mubr.bf16.gmra.mrb[0].mxu0 %v198
    %v302 = vpop.f32.mrb[0].mxu0
    %v303 = vadd.f32 %v219, %v302
    %v304 = vpop.f32.mrb[0].mxu0
    %v305 = vpop.f32.mrb[0].mxu0
    %v306 = vadd.f32 %v219, %v305
    %v307 = vpop.f32.mrb[0].mxu0
    %308 = vmatprep.mubr.bf16.mxu0 0
    %309 = vmatmul.mubr.bf16.gmra.mrb[0].mxu0 %v199
    %v310 = vpop.f32.mrb[0].mxu0
    %v311 = vadd.f32 %v219, %v310
    %v312 = vpop.f32.mrb[0].mxu0
    %v313 = vpop.f32.mrb[0].mxu0
    %v314 = vadd.f32 %v219, %v313
    %v315 = vpop.f32.mrb[0].mxu0
    %316 = vdwg.mxu0
    %v317 = vlaneseq
    %v318 = vand.u32 %v317, 127
    %vm319 = vcmp.lt.s32.totalorder %v318, 64
    %v320 = vsel %vm319, %v303, 0.0
    %v321 = vsel %vm319, %v306, 0.0
    %v322 = vsel %vm319, %v311, 0.0
    %v323 = vsel %vm319, %v314, 0.0
    %324 = vadd.xlane.f32.xlu0 %v320
    %v325 = vpop.xlane.xlu0 %324
    %326 = vadd.xlane.f32.xlu0 %v321
    %v327 = vpop.xlane.xlu0 %326
    %328 = vadd.xlane.f32.xlu0 %v322
    %v329 = vpop.xlane.xlu0 %328
    %330 = vadd.xlane.f32.xlu0 %v323
    %v331 = vpop.xlane.xlu0 %330
    %v332 = vmul.f32 %v325, 0.015625
    %v333 = vmul.f32 %v327, 0.015625
    %v334 = vmul.f32 %v329, 0.015625
    %v335 = vmul.f32 %v331, 0.015625
    %v336 = vsub.f32 %v303, %v332
    %v337 = vsub.f32 %v306, %v333
    %v338 = vsub.f32 %v311, %v334
    %v339 = vsub.f32 %v314, %v335
    %v340 = vsel %vm319, %v336, 0.0
    %v341 = vsel %vm319, %v337, 0.0
    %v342 = vsel %vm319, %v338, 0.0
    %v343 = vsel %vm319, %v339, 0.0
    %v344 = vmul.f32 %v340, %v340
    %v345 = vmul.f32 %v341, %v341
    %v346 = vmul.f32 %v342, %v342
    %v347 = vmul.f32 %v343, %v343
    %348 = vadd.xlane.f32.xlu0 %v344
    %v349 = vpop.xlane.xlu0 %348
    %350 = vadd.xlane.f32.xlu0 %v345
    %v351 = vpop.xlane.xlu0 %350
    %352 = vadd.xlane.f32.xlu0 %v346
    %v353 = vpop.xlane.xlu0 %352
    %354 = vadd.xlane.f32.xlu0 %v347
    %v355 = vpop.xlane.xlu0 %354
    %v356 = vmul.f32 %v349, 0.015625
    %v357 = vmul.f32 %v351, 0.015625
    %v358 = vmul.f32 %v353, 0.015625
    %v359 = vmul.f32 %v355, 0.015625
    %v360 = vadd.f32 %v356, 1e-05
    %v361 = vadd.f32 %v357, 1e-05
    %v362 = vadd.f32 %v358, 1e-05
    %v363 = vadd.f32 %v359, 1e-05
    %v364 = vrsqrt.pop %v360
    %v365 = vrsqrt.pop %v361
    %v366 = vrsqrt.pop %v362
    %v367 = vrsqrt.pop %v363
    %v368 = vmul.f32 %v340, %v364
    %v369 = vmul.f32 %v341, %v365
    %v370 = vmul.f32 %v342, %v366
    %v371 = vmul.f32 %v343, %v367
    %v372 = vlaneseq
    %v373 = vshrl.u32 %v372, 7
    %v374 = vsub.s32 2, %v373
    %v375 = vrot.slane %v60, %v374
    %v376 = vmul.f32 %v368, %v375
    %v377 = vmul.f32 %v369, %v375
    %v378 = vmul.f32 %v370, %v375
    %v379 = vmul.f32 %v371, %v375
    %v380 = vlaneseq
    %v381 = vshrl.u32 %v380, 7
    %v382 = vsub.s32 3, %v381
    %v383 = vrot.slane %v60, %v382
    %v384 = vadd.f32 %v376, %v383
    %v385 = vadd.f32 %v377, %v383
    %v386 = vadd.f32 %v378, %v383
    %v387 = vadd.f32 %v379, %v383
    %v388 = vsel %vm319, %v384, 0.0
    %v389 = vsel %vm319, %v385, 0.0
    %v390 = vsel %vm319, %v386, 0.0
    %v391 = vsel %vm319, %v387, 0.0
    %392 = vst [vmem:[#allocation8] sm:$0xff] %v388
    %393 = vst [vmem:[#allocation8 + $0x8] sm:$0xff] %v389
    %394 = vst [vmem:[#allocation8 + $0x10] sm:$0xff] %v390
    %395 = vst [vmem:[#allocation8 + $0x18] sm:$0xff] %v391
    // Predicated region
    $region30: #{tpu_custom_call.1} parent=1 // pred_check
      _
    $region31: #{tpu_custom_call.1} parent=1 // pred_check_branch
      %397 = sbr.rel (0) target = $region33
    $region32: #{tpu_custom_call.1} parent=1 // pred_region
      %s399 = ssub.s32 512, 512
      %400 = vsyncadd [#allocation4], %s399
      %s401 = sshll.u32 [#allocation8], 4
      %s402 = int_to_ptr.vmem [resolvable:$true] %s401
      %407 = dma.vmem_to_hbm [thread:$0]  %s402, 512, %s4, [#allocation4], 128, 128, 8
    $region33: #{tpu_custom_call.1} parent=1 // pred_fallthru
      _
    // Predicated region
    $region34: #{tpu_custom_call.1} parent=1 // pred_check
      _
    $region35: #{tpu_custom_call.1} parent=1 // pred_check_branch
      %409 = sbr.rel (0) target = $region37
    $region36: #{tpu_custom_call.1} parent=1 // pred_region
      %410 = dma.done [#allocation4], 512
    $region37: #{tpu_custom_call.1} parent=1 // pred_fallthru
      _
    %411 = vsyncpa [#allocation3], 1
    %412 = vsyncpa [#allocation6], 1
    %413 = vsyncpa [#allocation4], 1

</llo_original>
